<compile_context>
chip_gen: v7x
topology: tpu7x:2x2x1
jax: 0.10.0
libtpu: 0.0.40
codegen_flags: <defaults>
</compile_context>

<pallas_src>
import functools

import jax
import jax.numpy as jnp
from jax.experimental import pallas as pl
from jax.experimental.pallas import tpu as pltpu


def preemphasis_kernel(x_ref, prev_ref, o_ref, *, coef):
    # x_ref, o_ref: (b_tile, t_tile) with time on the lane axis.
    # prev_ref    : (b_tile, 1) boundary sample preceding this time tile.
    x = x_ref[...]
    # shifted[:, t] = x[:, t-1] for t >= 1 (lane rotate on the XLU; lane 0 wraps).
    shifted = pltpu.roll(x, shift=1, axis=1)
    o_ref[...] = (x - coef * shifted).astype(o_ref.dtype)
    # Lane-0 fix with one narrow store: the "previous sample" for lane 0 is the
    # boundary column (reflect value x[:, 1] for the first time tile, the last
    # sample of the previous tile otherwise).
    o_ref[:, 0:1] = (x[:, 0:1] - coef * prev_ref[...]).astype(o_ref.dtype)


def _choose_tiles(B, T, itemsize):
    # Time (lane) tile: multiple of 128 so stores are lane-dense and unmasked
    # (only the final ragged tile, if any, is masked).  8192 lanes amortize the
    # per-grid-step overhead while giving many grid steps for T ~ 59k audio.
    T_TILE_MAX = 8192
    t_tile = T_TILE_MAX if T > T_TILE_MAX else T   # block dim == full dim is legal
    num_t = pl.cdiv(T, t_tile)

    # Batch (sublane) tile: target ~2 MiB per pipelined block.  With 2x-in +
    # 2x-out double buffers that is ~8 MiB of VMEM -- comfortable headroom under
    # v5e's 16 MiB scoped default and v7x's 32 MiB scoped (64 MiB physical).
    target_block_bytes = 2 * 1024 * 1024
    rows = max(8, (target_block_bytes // max(t_tile * itemsize, 1)) // 8 * 8)
    if B <= 8:
        b_tile = B
    elif rows >= B:
        if num_t == 1 and B >= 16:
            # Guarantee >= 2 parallel grid steps so v7x can use both TensorCores.
            b_tile = ((B + 15) // 16) * 8
        else:
            b_tile = B
    else:
        b_tile = rows
    return b_tile, t_tile


def preemphasis(x, coef=0.97):
    """x: (B, T) waveform. Returns (B, 1, T), matching F.conv1d's output shape."""
    assert x.ndim == 2, "The number of dimensions of input tensor must be 2!"
    B, T = x.shape
    assert T >= 2, "reflect padding by 1 requires at least 2 samples"

    b_tile, t_tile = _choose_tiles(B, T, x.dtype.itemsize)
    num_b = pl.cdiv(B, b_tile)
    num_t = pl.cdiv(T, t_tile)

    # Boundary sample preceding each time tile, computed once in the wrapper so
    # both grid axes stay "parallel".  Shape (num_t, B, 1); negligible traffic.
    cols = [x[:, 1:2]] + [x[:, j * t_tile - 1:j * t_tile] for j in range(1, num_t)]
    prev = jnp.stack(cols, axis=0)

    out = pl.pallas_call(
        functools.partial(preemphasis_kernel, coef=coef),
        out_shape=jax.ShapeDtypeStruct((B, T), x.dtype),
        grid_spec=pltpu.PrefetchScalarGridSpec(
            num_scalar_prefetch=0,
            grid=(num_b, num_t),
            in_specs=[
                pl.BlockSpec((b_tile, t_tile), lambda i, j: (i, j)),
                pl.BlockSpec((None, b_tile, 1), lambda i, j: (j, i, 0)),
            ],
            out_specs=pl.BlockSpec((b_tile, t_tile), lambda i, j: (i, j)),
        ),
        compiler_params=pltpu.CompilerParams(
            dimension_semantics=("parallel", "parallel")),  # megacore-friendly
    )(x, prev)
    return out[:, None, :]


def preemphasis_ref(x, coef=0.97):
    # Pure-JAX reference: reflect-pad left by 1, then valid conv with [-coef, 1].
    x_pad = jnp.concatenate([x[:, 1:2], x], axis=1)
    return ((-coef) * x_pad[:, :-1] + x_pad[:, 1:])[:, None, :]


if __name__ == "__main__":
    coef = 0.97
    key = jax.random.PRNGKey(0)
    k1, k2, k3 = jax.random.split(key, 3)

    # Small waveform batch (the module's natural input): (batch=2, samples=512).
    x1 = jax.random.normal(k1, (2, 512), dtype=jnp.float32)
    out1 = jax.block_until_ready(preemphasis(x1, coef))
    assert out1.shape == (2, 1, 512)
    assert jnp.allclose(out1, preemphasis_ref(x1, coef), atol=1e-5, rtol=1e-5)

    # Multiple batch tiles with a partial last batch tile.
    x2 = jax.random.normal(k2, (40, 128), dtype=jnp.float32)
    out2 = jax.block_until_ready(preemphasis(x2, coef))
    assert out2.shape == (40, 1, 128)
    assert jnp.allclose(out2, preemphasis_ref(x2, coef), atol=1e-5, rtol=1e-5)

    # Multiple time tiles with a ragged tail (exercises the boundary column).
    x3 = jax.random.normal(k3, (2, 12345), dtype=jnp.float32)
    out3 = jax.block_until_ready(preemphasis(x3, coef))
    assert out3.shape == (2, 1, 12345)
    assert jnp.allclose(out3, preemphasis_ref(x3, coef), atol=1e-5, rtol=1e-5)

    print("KERNEL_OK")
</pallas_src>

<mosaic_0001>
module attributes {stable_mosaic.version = 11 : i64} {
  func.func @preemphasis_kernel(%arg0: i32, %arg1: i32, %arg2: memref<2x512xf32, #tpu.memory_space<vmem>>, %arg3: memref<1x2x1xf32, #tpu.memory_space<vmem>>, %arg4: memref<2x512xf32, #tpu.memory_space<vmem>>) attributes {dimension_semantics = [#tpu.dimension_semantics<parallel>, #tpu.dimension_semantics<parallel>], iteration_bounds = array<i64: 1, 1>, scalar_prefetch = 0 : i64, scratch_operands = 0 : i64, tpu.core_type = #tpu.core_type<tc>, window_params = [{transform_indices = @transform_0, window_bounds = array<i64: 2, 512>}, {transform_indices = @transform_1, window_bounds = array<i64: 1, 2, 1>}, {transform_indices = @transform_2, window_bounds = array<i64: 2, 512>}]} {
    %c0 = arith.constant 0 : index
    %c0_0 = arith.constant 0 : index
    %0 = vector.load %arg2[%c0, %c0_0] : memref<2x512xf32, #tpu.memory_space<vmem>>, vector<2x512xf32>
    %c1_i32 = arith.constant 1 : i32
    %1 = tpu.dynamic_rotate %0 by %c1_i32 dim 1 : vector<2x512xf32>, i32 -> vector<2x512xf32>
    %cst = arith.constant 9.700000e-01 : f32
    %2 = vector.broadcast %cst : f32 to vector<2x512xf32>
    %3 = arith.mulf %2, %1 : vector<2x512xf32>
    %4 = arith.subf %0, %3 : vector<2x512xf32>
    %c0_1 = arith.constant 0 : index
    %c0_2 = arith.constant 0 : index
    %5 = vector.load %arg4[%c0_1, %c0_2] : memref<2x512xf32, #tpu.memory_space<vmem>>, vector<2x512xf32>
    tpu.vector_store %arg4[%c0_1, %c0_2], %4 {strides = array<i32>} : memref<2x512xf32, #tpu.memory_space<vmem>>, vector<2x512xf32>,
    %6 = vector.extract_strided_slice %0 {offsets = [0, 0], sizes = [2, 1], strides = [1, 1]} : vector<2x512xf32> to vector<2x1xf32>
    %c0_3 = arith.constant 0 : index
    %c0_4 = arith.constant 0 : index
    %c0_5 = arith.constant 0 : index
    %7 = vector.load %arg3[%c0_3, %c0_4, %c0_5] : memref<1x2x1xf32, #tpu.memory_space<vmem>>, vector<1x2x1xf32>
    %8 = vector.shape_cast %7 : vector<1x2x1xf32> to vector<2x1xf32>
    %cst_6 = arith.constant 9.700000e-01 : f32
    %9 = vector.broadcast %cst_6 : f32 to vector<2x1xf32>
    %10 = arith.mulf %9, %8 : vector<2x1xf32>
    %11 = arith.subf %6, %10 : vector<2x1xf32>
    %c0_7 = arith.constant 0 : index
    %c0_8 = arith.constant 0 : index
    %12 = vector.load %arg4[%c0_7, %c0_8] : memref<2x512xf32, #tpu.memory_space<vmem>>, vector<2x1xf32>
    tpu.vector_store %arg4[%c0_7, %c0_8], %11 {strides = array<i32>} : memref<2x512xf32, #tpu.memory_space<vmem>>, vector<2x1xf32>,
    return
  }
  func.func @transform_0(%arg0: i32, %arg1: i32) -> (i32, i32) {
    %c0_i32 = arith.constant 0 : i32
    return %arg0, %arg1 : i32, i32
  }
  func.func @transform_1(%arg0: i32, %arg1: i32) -> (i32, i32, i32) {
    %c0_i32 = arith.constant 0 : i32
    %c0_i32_0 = arith.constant 0 : i32
    return %arg1, %arg0, %c0_i32 : i32, i32, i32
  }
  func.func @transform_2(%arg0: i32, %arg1: i32) -> (i32, i32) {
    %c0_i32 = arith.constant 0 : i32
    return %arg0, %arg1 : i32, i32
  }
}

</mosaic_0001>

<llo_original>
// kernel: tpu_custom_call.1
$region0: #{tpu_custom_call.1}
  #allocation0 [shape = 'u32[]', space=smem, size = 0x4, offset = 0x4, fixed_abs, tag = 'smem constant byte address 0x4 - core index']
  #allocation1 [shape = 'u32[144,128]{1,0:T(1,128)}', space=vmem, size = 0x12000, scoped, tag = 'internal scratch']
  %s0 = inlined_call_operand.hbm [shape: f32[2,512], index: 0, kind: input, shape index: {}]
  %s1 = inlined_call_operand.vmem [shape: f32[1,2,1], index: 1, kind: input, shape index: {}]
  %s2 = inlined_call_operand.hbm [shape: f32[2,512], index: 2, kind: output, shape index: {}]
  %s3 = sld [smem:[#allocation0]]
  $region22: #{tpu_custom_call.1} parent=0
    _
  %s5 = ssub.s32 1, %s3
  %s6 = scalar_select 0, %s5, %s3
  $region1: #{tpu_custom_call.1} parent=0
    #allocation2 [shape = 'u8[4096]{0}', space=vmem, size = 0x1000, scoped, tag = 'input window, operand 0, single buffered']
    #allocation3 [shape = 's32[1]{0}', space=sflag, size = 0x4, scoped, tag = 'scoped memory for tpu_custom_call.1']
    #allocation4 [shape = 's32[1]{0}', space=sflag, size = 0x4, scoped, tag = 'scoped memory for tpu_custom_call.1']
    #allocation5 [shape = 'u8[4096]{0}', space=vmem, size = 0x1000, scoped, tag = 'output window, operand 0, single buffered']
    %7 = vsyncpa [#allocation3], 0
    %8 = vsyncpa [#allocation4], 0
    // Predicated region
    $region2: #{tpu_custom_call.1} parent=1 // pred_check
      _
    $region3: #{tpu_custom_call.1} parent=1 // pred_check_branch
      %10 = sbr.rel (0) target = $region5
    $region4: #{tpu_custom_call.1} parent=1 // pred_region
      %s12 = ssub.s32 128, 128
      %13 = vsyncadd [#allocation3], %s12
      %s15 = sshll.u32 [#allocation2], 4
      %s16 = int_to_ptr.vmem [resolvable:$true] %s15
      %18 = dma.hbm_to_vmem [thread:$0]  %s0, 128, %s16, [#allocation3]
    $region5: #{tpu_custom_call.1} parent=1 // pred_fallthru
      _
    // Predicated region
    $region6: #{tpu_custom_call.1} parent=1 // pred_check
      _
    $region7: #{tpu_custom_call.1} parent=1 // pred_check_branch
      %20 = sbr.rel (0) target = $region9
    $region8: #{tpu_custom_call.1} parent=1 // pred_region
      _
    $region9: #{tpu_custom_call.1} parent=1 // pred_fallthru
      _
    // Predicated region
    $region10: #{tpu_custom_call.1} parent=1 // pred_check
      _
    $region11: #{tpu_custom_call.1} parent=1 // pred_check_branch
      %22 = sbr.rel (0) target = $region13
    $region12: #{tpu_custom_call.1} parent=1 // pred_region
      %23 = dma.done [#allocation3], 128
    $region13: #{tpu_custom_call.1} parent=1 // pred_fallthru
      _
    %v24 = vld [vmem:[#allocation2] sm:$0xff]
    %v26 = vcombine.high %v24, %v24
    %v28 = vunpack.c.l.s4 1983009808
    %v29 = vunpack.c.0.s8 %v28
    %v30 = vlaneseq
    %v31 = vshrl.u32 %v30, 7
    %v32 = vsub.s32 %v29, %v31
    %v33 = vrot.slane %v24, %v32
    %v35 = vunpack.c.l.s4 1983009808
    %v36 = vunpack.c.0.s8 %v35
    %v37 = vlaneseq
    %v38 = vshrl.u32 %v37, 7
    %v39 = vsub.s32 %v36, %v38
    %v40 = vrot.slane %v26, %v39
    %v41 = vcombine.high %v33, %v33
    %v42 = vcombine.high %v40, %v40
    %47 = vrot.lane.b32.xlu0 %v33, 1
    %v48 = vpop.permute.xlu0 %47
    %49 = vrot.lane.b32.xlu0 %v41, 1
    %v50 = vpop.permute.xlu0 %49
    %51 = vrot.lane.b32.xlu0 %v40, 1
    %v52 = vpop.permute.xlu0 %51
    %53 = vrot.lane.b32.xlu0 %v42, 1
    %v54 = vpop.permute.xlu0 %53
    %v55 = vlaneseq
    %v56 = vand.u32 %v55, 127
    %vm57 = vcmp.lt.s32.totalorder %v56, 1
    %v58 = vsel %vm57, %v52, %v54
    %v59 = vsel %vm57, %v50, %v52
    %v60 = vsel %vm57, %v48, %v50
    %v61 = vsel %vm57, %v54, %v48
    %v62 = vmul.f32 %v61, 0.97
    %v63 = vmul.f32 %v60, 0.97
    %v64 = vmul.f32 %v59, 0.97
    %v65 = vmul.f32 %v58, 0.97
    %v70 = vcombine.low %v62, %v63
    %v71 = vcombine.low %v64, %v65
    %v73 = vunpack.c.l.s4 1983009808
    %v74 = vunpack.c.0.s8 %v73
    %v75 = vlaneseq
    %v76 = vshrl.u32 %v75, 7
    %v77 = vsub.s32 %v74, %v76
    %v78 = vrot.slane %v70, %v77
    %v80 = vunpack.c.l.s4 1983009808
    %v81 = vunpack.c.0.s8 %v80
    %v82 = vlaneseq
    %v83 = vshrl.u32 %v82, 7
    %v84 = vsub.s32 %v81, %v83
    %v85 = vrot.slane %v71, %v84
    %v86 = vcombine.low %v78, %v85
    %v88 = vsub.f32 %v24, %v86
    %89 = vst [vmem:[#allocation5] sm:$0xff] %v88
    %v90 = vld [vmem:[%s1] sm:$0x3]
    %v91 = vmul.f32 %v90, 0.97
    %v92 = vsub.f32 %v24, %v91
    %vm93 = vcmask 1024
    %94 = vst.msk [vmem:[#allocation5] sm:$0x3] %vm93, %v92
    // Predicated region
    $region14: #{tpu_custom_call.1} parent=1 // pred_check
      _
    $region15: #{tpu_custom_call.1} parent=1 // pred_check_branch
      %96 = sbr.rel (0) target = $region17
    $region16: #{tpu_custom_call.1} parent=1 // pred_region
      %s98 = ssub.s32 128, 128
      %99 = vsyncadd [#allocation4], %s98
      %s101 = sshll.u32 [#allocation5], 4
      %s102 = int_to_ptr.vmem [resolvable:$true] %s101
      %104 = dma.vmem_to_hbm [thread:$0]  %s102, 128, %s2, [#allocation4]
    $region17: #{tpu_custom_call.1} parent=1 // pred_fallthru
      _
    // Predicated region
    $region18: #{tpu_custom_call.1} parent=1 // pred_check
      _
    $region19: #{tpu_custom_call.1} parent=1 // pred_check_branch
      %106 = sbr.rel (0) target = $region21
    $region20: #{tpu_custom_call.1} parent=1 // pred_region
      %107 = dma.done [#allocation4], 128
    $region21: #{tpu_custom_call.1} parent=1 // pred_fallthru
      _
    %108 = vsyncpa [#allocation3], 1
    %109 = vsyncpa [#allocation4], 1

</llo_original>
